<compile_context>
chip_gen: v5e
topology: v5e:2x2
jax: 0.10.0
libtpu: 0.0.40
codegen_flags: <defaults>
</compile_context>

<pallas_src>
import functools

import jax
import jax.numpy as jnp
import numpy as np
from jax.experimental import pallas as pl
from jax.experimental.pallas import tpu as pltpu

BN_EPS = 1e-5  # PyTorch BatchNorm3d default


def _bn_relu(y, gamma, beta, inv_m):
    """Training-mode BN (biased variance over all voxels) + ReLU.

    y: (C_out, M); gamma/beta: (C_out, 1) columns.  Two-pass statistics
    (mean, then centered sum-of-squares) over the lane axis, folded into a
    fused scale/shift so the epilogue is one multiply-add per element.
    """
    mean = jnp.sum(y, axis=-1, keepdims=True) * inv_m                # (C, 1)
    centered = y - mean
    var = jnp.sum(centered * centered, axis=-1, keepdims=True) * inv_m
    scale = gamma * jax.lax.rsqrt(var + BN_EPS)
    shift = beta - mean * scale
    return jnp.maximum(y * scale + shift, 0.0)


def encoder_kernel(x_ref, w_ref, gb_ref, out_ref, *, dims, inv_m):
    # x_ref:  (N, C_in, DHW)
    # w_ref:  (3, C1, C0) packed weights; w3 stored transposed as a column.
    # gb_ref: (3, C1, 2) packed gamma (col 0) / beta (col 1).
    c0, c1, c2 = dims
    n = x_ref.shape[0]

    w1 = w_ref[0, :c1, :c0]          # (C/2, C)
    w2 = w_ref[1, :c2, :c1]          # (C/4, C/2)
    w3 = w_ref[2, :c2, 0:1]          # (C/4, 1)   (stored transposed)

    # layer1: 1x1x1 conv == (C_out, C_in) @ (C_in, DHW) per batch slice; the
    # lane concat happens on the smaller layer-1 outputs, not the inputs.
    y = jnp.concatenate(
        [jnp.dot(w1, x_ref[i], preferred_element_type=jnp.float32)
         for i in range(n)],
        axis=-1)                                                     # (C/2, M)
    y = _bn_relu(y, gb_ref[0, :c1, 0:1], gb_ref[0, :c1, 1:2], inv_m)

    # layer2
    y = jnp.dot(w2, y, preferred_element_type=jnp.float32)           # (C/4, M)
    y = _bn_relu(y, gb_ref[1, :c2, 0:1], gb_ref[1, :c2, 1:2], inv_m)

    # layer3: C_out == 1 -> VPU broadcast-multiply + sublane (XLU) reduction
    # instead of a one-row MXU matmul.
    y = jnp.sum(w3 * y, axis=0, keepdims=True)                       # (1, M)
    y = _bn_relu(y, gb_ref[2, 0:1, 0:1], gb_ref[2, 0:1, 1:2], inv_m)

    out_ref[...] = y.astype(out_ref.dtype)


def pack_params(params):
    """Pack the 9 per-layer parameter arrays into 2 slabs (3 kernel inputs total)."""
    w1, g1, b1, w2, g2, b2, w3, g3, b3 = (np.asarray(p, np.float32) for p in params)
    c1, c0 = w1.shape                 # (C/2, C)
    c2 = w2.shape[0]                  # C/4

    w_slab = np.zeros((3, c1, c0), np.float32)
    w_slab[0, :c1, :c0] = w1
    w_slab[1, :c2, :c1] = w2
    w_slab[2, :c2, 0] = w3[0]         # store w3 (1, C/4) transposed as a column

    gb_slab = np.zeros((3, c1, 2), np.float32)
    gb_slab[0, :c1, 0] = g1
    gb_slab[0, :c1, 1] = b1
    gb_slab[1, :c2, 0] = g2
    gb_slab[1, :c2, 1] = b2
    gb_slab[2, 0, 0] = g3[0]
    gb_slab[2, 0, 1] = b3[0]
    return jnp.asarray(w_slab), jnp.asarray(gb_slab)


def cost_volume_3d_context_encoder(x_ncdhw, w_slab, gb_slab):
    """x_ncdhw: (N, C, D, H, W) float32. Returns (N, 1, D, H, W) float32."""
    N, C, D, H, W = x_ncdhw.shape
    DHW = D * H * W
    M = N * DHW
    dims = (C, C // 2, C // 4)

    # NCDHW is already channels-on-sublane / voxels-on-lane: free reshape only.
    x3d = x_ncdhw.reshape(N, C, DHW)

    vmem = pl.BlockSpec(memory_space=pltpu.MemorySpace.VMEM)
    kernel = functools.partial(encoder_kernel, dims=dims, inv_m=float(1.0 / M))

    out = pl.pallas_call(
        kernel,
        out_shape=jax.ShapeDtypeStruct((1, M), jnp.float32),
        in_specs=[vmem, vmem, vmem],
        out_specs=vmem,
        compiler_params=pltpu.CompilerParams(vmem_limit_bytes=32 * 1024 * 1024),
    )(x3d, w_slab, gb_slab)

    # (1, N*DHW) has the same flat element order as (N, 1, D, H, W): free reshape.
    return out.reshape(N, 1, D, H, W)


def make_params(key, in_channels):
    """Deterministic synthetic parameters matching the module's shapes.

    Conv weights are PyTorch-convention (C_out, C_in) (1x1x1 kernel squeezed);
    BN gamma/beta are (C_out,) vectors.
    """
    dims = [in_channels, in_channels // 2, in_channels // 4, 1]
    params = []
    for i in range(3):
        cin, cout = dims[i], dims[i + 1]
        key, kw, kg, kb = jax.random.split(key, 4)
        limit = float(np.sqrt(6.0 / (cin + cout)))  # xavier_uniform
        w = jax.random.uniform(kw, (cout, cin), jnp.float32, -limit, limit)
        gamma = 1.0 + 0.1 * jax.random.normal(kg, (cout,), jnp.float32)
        beta = 0.1 * jax.random.normal(kb, (cout,), jnp.float32)
        params += [w, gamma, beta]
    return params


def reference_forward(x_ncdhw, params):
    """Pure-JAX reference mirroring the PyTorch forward (training-mode BN)."""
    N, C, D, H, W = x_ncdhw.shape
    y = jnp.transpose(x_ncdhw, (0, 2, 3, 4, 1)).reshape(-1, C)
    for i in range(3):
        w, g, b = params[3 * i], params[3 * i + 1], params[3 * i + 2]
        y = y @ w.T
        mean = jnp.mean(y, axis=0, keepdims=True)
        var = jnp.mean((y - mean) ** 2, axis=0, keepdims=True)
        y = (y - mean) / jnp.sqrt(var + BN_EPS) * g + b
        y = jnp.maximum(y, 0.0)
    return jnp.transpose(y.reshape(N, D, H, W, 1), (0, 4, 1, 2, 3))


if __name__ == "__main__":
    in_channels = 32
    N, D, H, W = 2, 4, 8, 8

    key = jax.random.PRNGKey(0)
    kx, kp = jax.random.split(key)
    x = jax.random.normal(kx, (N, in_channels, D, H, W), jnp.float32)
    params = make_params(kp, in_channels)
    w_slab, gb_slab = pack_params(params)   # packed once, reused every call

    out = cost_volume_3d_context_encoder(x, w_slab, gb_slab)
    out = jax.block_until_ready(out)

    ref = jax.block_until_ready(reference_forward(x, params))
    assert out.shape == (N, 1, D, H, W), out.shape
    np.testing.assert_allclose(np.asarray(out), np.asarray(ref), rtol=1e-4, atol=1e-4)

    print("KERNEL_OK")
</pallas_src>

<mosaic_0001>
module attributes {stable_mosaic.version = 11 : i64} {
  func.func @encoder_kernel(%arg0: memref<2x32x256xf32, #tpu.memory_space<vmem>>, %arg1: memref<3x16x32xf32, #tpu.memory_space<vmem>>, %arg2: memref<3x16x2xf32, #tpu.memory_space<vmem>>, %arg3: memref<1x512xf32, #tpu.memory_space<vmem>>) attributes {dimension_semantics = [], scalar_prefetch = 0 : i64, scratch_operands = 0 : i64, tpu.core_type = #tpu.core_type<tc>} {
    %c0 = arith.constant 0 : index
    %c0_0 = arith.constant 0 : index
    %c0_1 = arith.constant 0 : index
    %0 = vector.load %arg1[%c0, %c0_0, %c0_1] : memref<3x16x32xf32, #tpu.memory_space<vmem>>, vector<1x16x32xf32>
    %1 = vector.shape_cast %0 : vector<1x16x32xf32> to vector<16x32xf32>
    %c1 = arith.constant 1 : index
    %c0_2 = arith.constant 0 : index
    %c0_3 = arith.constant 0 : index
    %2 = vector.load %arg1[%c1, %c0_2, %c0_3] : memref<3x16x32xf32, #tpu.memory_space<vmem>>, vector<1x8x16xf32>
    %3 = vector.shape_cast %2 : vector<1x8x16xf32> to vector<8x16xf32>
    %c2 = arith.constant 2 : index
    %c0_4 = arith.constant 0 : index
    %c0_5 = arith.constant 0 : index
    %4 = vector.load %arg1[%c2, %c0_4, %c0_5] : memref<3x16x32xf32, #tpu.memory_space<vmem>>, vector<1x8x1xf32>
    %5 = vector.shape_cast %4 : vector<1x8x1xf32> to vector<8x1xf32>
    %c0_6 = arith.constant 0 : index
    %c0_7 = arith.constant 0 : index
    %c0_8 = arith.constant 0 : index
    %6 = vector.load %arg0[%c0_6, %c0_7, %c0_8] : memref<2x32x256xf32, #tpu.memory_space<vmem>>, vector<1x32x256xf32>
    %7 = vector.shape_cast %6 : vector<1x32x256xf32> to vector<32x256xf32>
    %cst = arith.constant dense<0.000000e+00> : vector<16x256xf32>
    %8 = tpu.matmul %1, %7, %cst {dimension_numbers = #tpu.dot_dimension_numbers<[1], [0], [0], [1], [0, 0, 1, 1], [], []>} : vector<16x32xf32>, vector<32x256xf32>, vector<16x256xf32> -> vector<16x256xf32>
    %c1_9 = arith.constant 1 : index
    %c0_10 = arith.constant 0 : index
    %c0_11 = arith.constant 0 : index
    %9 = vector.load %arg0[%c1_9, %c0_10, %c0_11] : memref<2x32x256xf32, #tpu.memory_space<vmem>>, vector<1x32x256xf32>
    %10 = vector.shape_cast %9 : vector<1x32x256xf32> to vector<32x256xf32>
    %cst_12 = arith.constant dense<0.000000e+00> : vector<16x256xf32>
    %11 = tpu.matmul %1, %10, %cst_12 {dimension_numbers = #tpu.dot_dimension_numbers<[1], [0], [0], [1], [0, 0, 1, 1], [], []>} : vector<16x32xf32>, vector<32x256xf32>, vector<16x256xf32> -> vector<16x256xf32>
    %12 = tpu.concatenate %8, %11 in 1 : vector<16x256xf32>, vector<16x256xf32> -> vector<16x512xf32>
    %c0_13 = arith.constant 0 : index
    %c0_14 = arith.constant 0 : index
    %c0_15 = arith.constant 0 : index
    %13 = vector.load %arg2[%c0_13, %c0_14, %c0_15] : memref<3x16x2xf32, #tpu.memory_space<vmem>>, vector<1x16x1xf32>
    %14 = vector.shape_cast %13 : vector<1x16x1xf32> to vector<16x1xf32>
    %c0_16 = arith.constant 0 : index
    %c0_17 = arith.constant 0 : index
    %c1_18 = arith.constant 1 : index
    %15 = vector.load %arg2[%c0_16, %c0_17, %c1_18] : memref<3x16x2xf32, #tpu.memory_space<vmem>>, vector<1x16x1xf32>
    %16 = vector.shape_cast %15 : vector<1x16x1xf32> to vector<16x1xf32>
    %cst_19 = arith.constant dense<0.000000e+00> : vector<16xf32>
    %17 = vector.multi_reduction <add>, %12, %cst_19 [1] : vector<16x512xf32> to vector<16xf32>
    %18 = vector.shape_cast %17 : vector<16xf32> to vector<16x1xf32>
    %cst_20 = arith.constant 0.001953125 : f32
    %19 = vector.broadcast %cst_20 : f32 to vector<16x1xf32>
    %20 = arith.mulf %18, %19 : vector<16x1xf32>
    %21 = vector.broadcast %20 : vector<16x1xf32> to vector<16x512xf32>
    %22 = arith.subf %12, %21 : vector<16x512xf32>
    %23 = arith.mulf %22, %22 : vector<16x512xf32>
    %cst_21 = arith.constant dense<0.000000e+00> : vector<16xf32>
    %24 = vector.multi_reduction <add>, %23, %cst_21 [1] : vector<16x512xf32> to vector<16xf32>
    %25 = vector.shape_cast %24 : vector<16xf32> to vector<16x1xf32>
    %cst_22 = arith.constant 0.001953125 : f32
    %26 = vector.broadcast %cst_22 : f32 to vector<16x1xf32>
    %27 = arith.mulf %25, %26 : vector<16x1xf32>
    %cst_23 = arith.constant 9.99999974E-6 : f32
    %28 = vector.broadcast %cst_23 : f32 to vector<16x1xf32>
    %29 = arith.addf %27, %28 : vector<16x1xf32>
    %30 = math.rsqrt %29 : vector<16x1xf32>
    %31 = arith.mulf %14, %30 : vector<16x1xf32>
    %32 = arith.mulf %20, %31 : vector<16x1xf32>
    %33 = arith.subf %16, %32 : vector<16x1xf32>
    %34 = vector.broadcast %31 : vector<16x1xf32> to vector<16x512xf32>
    %35 = arith.mulf %12, %34 : vector<16x512xf32>
    %36 = vector.broadcast %33 : vector<16x1xf32> to vector<16x512xf32>
    %37 = arith.addf %35, %36 : vector<16x512xf32>
    %cst_24 = arith.constant 0.000000e+00 : f32
    %38 = vector.broadcast %cst_24 : f32 to vector<16x512xf32>
    %39 = arith.maximumf %37, %38 : vector<16x512xf32>
    %cst_25 = arith.constant dense<0.000000e+00> : vector<8x512xf32>
    %40 = tpu.matmul %3, %39, %cst_25 {dimension_numbers = #tpu.dot_dimension_numbers<[1], [0], [0], [1], [0, 0, 1, 1], [], []>} : vector<8x16xf32>, vector<16x512xf32>, vector<8x512xf32> -> vector<8x512xf32>
    %c1_26 = arith.constant 1 : index
    %c0_27 = arith.constant 0 : index
    %c0_28 = arith.constant 0 : index
    %41 = vector.load %arg2[%c1_26, %c0_27, %c0_28] : memref<3x16x2xf32, #tpu.memory_space<vmem>>, vector<1x8x1xf32>
    %42 = vector.shape_cast %41 : vector<1x8x1xf32> to vector<8x1xf32>
    %c1_29 = arith.constant 1 : index
    %c0_30 = arith.constant 0 : index
    %c1_31 = arith.constant 1 : index
    %43 = vector.load %arg2[%c1_29, %c0_30, %c1_31] : memref<3x16x2xf32, #tpu.memory_space<vmem>>, vector<1x8x1xf32>
    %44 = vector.shape_cast %43 : vector<1x8x1xf32> to vector<8x1xf32>
    %cst_32 = arith.constant dense<0.000000e+00> : vector<8xf32>
    %45 = vector.multi_reduction <add>, %40, %cst_32 [1] : vector<8x512xf32> to vector<8xf32>
    %46 = vector.shape_cast %45 : vector<8xf32> to vector<8x1xf32>
    %cst_33 = arith.constant 0.001953125 : f32
    %47 = vector.broadcast %cst_33 : f32 to vector<8x1xf32>
    %48 = arith.mulf %46, %47 : vector<8x1xf32>
    %49 = vector.broadcast %48 : vector<8x1xf32> to vector<8x512xf32>
    %50 = arith.subf %40, %49 : vector<8x512xf32>
    %51 = arith.mulf %50, %50 : vector<8x512xf32>
    %cst_34 = arith.constant dense<0.000000e+00> : vector<8xf32>
    %52 = vector.multi_reduction <add>, %51, %cst_34 [1] : vector<8x512xf32> to vector<8xf32>
    %53 = vector.shape_cast %52 : vector<8xf32> to vector<8x1xf32>
    %cst_35 = arith.constant 0.001953125 : f32
    %54 = vector.broadcast %cst_35 : f32 to vector<8x1xf32>
    %55 = arith.mulf %53, %54 : vector<8x1xf32>
    %cst_36 = arith.constant 9.99999974E-6 : f32
    %56 = vector.broadcast %cst_36 : f32 to vector<8x1xf32>
    %57 = arith.addf %55, %56 : vector<8x1xf32>
    %58 = math.rsqrt %57 : vector<8x1xf32>
    %59 = arith.mulf %42, %58 : vector<8x1xf32>
    %60 = arith.mulf %48, %59 : vector<8x1xf32>
    %61 = arith.subf %44, %60 : vector<8x1xf32>
    %62 = vector.broadcast %59 : vector<8x1xf32> to vector<8x512xf32>
    %63 = arith.mulf %40, %62 : vector<8x512xf32>
    %64 = vector.broadcast %61 : vector<8x1xf32> to vector<8x512xf32>
    %65 = arith.addf %63, %64 : vector<8x512xf32>
    %cst_37 = arith.constant 0.000000e+00 : f32
    %66 = vector.broadcast %cst_37 : f32 to vector<8x512xf32>
    %67 = arith.maximumf %65, %66 : vector<8x512xf32>
    %68 = vector.broadcast %5 : vector<8x1xf32> to vector<8x512xf32>
    %69 = arith.mulf %68, %67 : vector<8x512xf32>
    %cst_38 = arith.constant dense<0.000000e+00> : vector<512xf32>
    %70 = vector.multi_reduction <add>, %69, %cst_38 [0] : vector<8x512xf32> to vector<512xf32>
    %71 = vector.shape_cast %70 : vector<512xf32> to vector<1x512xf32>
    %c2_39 = arith.constant 2 : index
    %c0_40 = arith.constant 0 : index
    %c0_41 = arith.constant 0 : index
    %72 = vector.load %arg2[%c2_39, %c0_40, %c0_41] : memref<3x16x2xf32, #tpu.memory_space<vmem>>, vector<1x1x1xf32>
    %73 = vector.shape_cast %72 : vector<1x1x1xf32> to vector<1x1xf32>
    %c2_42 = arith.constant 2 : index
    %c0_43 = arith.constant 0 : index
    %c1_44 = arith.constant 1 : index
    %74 = vector.load %arg2[%c2_42, %c0_43, %c1_44] : memref<3x16x2xf32, #tpu.memory_space<vmem>>, vector<1x1x1xf32>
    %75 = vector.shape_cast %74 : vector<1x1x1xf32> to vector<1x1xf32>
    %cst_45 = arith.constant dense<0.000000e+00> : vector<1xf32>
    %76 = vector.multi_reduction <add>, %71, %cst_45 [1] : vector<1x512xf32> to vector<1xf32>
    %77 = vector.shape_cast %76 : vector<1xf32> to vector<1x1xf32>
    %cst_46 = arith.constant 0.001953125 : f32
    %78 = vector.broadcast %cst_46 : f32 to vector<1x1xf32>
    %79 = arith.mulf %77, %78 : vector<1x1xf32>
    %80 = vector.broadcast %79 : vector<1x1xf32> to vector<1x512xf32>
    %81 = arith.subf %71, %80 : vector<1x512xf32>
    %82 = arith.mulf %81, %81 : vector<1x512xf32>
    %cst_47 = arith.constant dense<0.000000e+00> : vector<1xf32>
    %83 = vector.multi_reduction <add>, %82, %cst_47 [1] : vector<1x512xf32> to vector<1xf32>
    %84 = vector.shape_cast %83 : vector<1xf32> to vector<1x1xf32>
    %cst_48 = arith.constant 0.001953125 : f32
    %85 = vector.broadcast %cst_48 : f32 to vector<1x1xf32>
    %86 = arith.mulf %84, %85 : vector<1x1xf32>
    %cst_49 = arith.constant 9.99999974E-6 : f32
    %87 = vector.broadcast %cst_49 : f32 to vector<1x1xf32>
    %88 = arith.addf %86, %87 : vector<1x1xf32>
    %89 = math.rsqrt %88 : vector<1x1xf32>
    %90 = arith.mulf %73, %89 : vector<1x1xf32>
    %91 = arith.mulf %79, %90 : vector<1x1xf32>
    %92 = arith.subf %75, %91 : vector<1x1xf32>
    %93 = vector.broadcast %90 : vector<1x1xf32> to vector<1x512xf32>
    %94 = arith.mulf %71, %93 : vector<1x512xf32>
    %95 = vector.broadcast %92 : vector<1x1xf32> to vector<1x512xf32>
    %96 = arith.addf %94, %95 : vector<1x512xf32>
    %cst_50 = arith.constant 0.000000e+00 : f32
    %97 = vector.broadcast %cst_50 : f32 to vector<1x512xf32>
    %98 = arith.maximumf %96, %97 : vector<1x512xf32>
    %c0_51 = arith.constant 0 : index
    %c0_52 = arith.constant 0 : index
    %99 = vector.load %arg3[%c0_51, %c0_52] : memref<1x512xf32, #tpu.memory_space<vmem>>, vector<1x512xf32>
    tpu.vector_store %arg3[%c0_51, %c0_52], %98 {strides = array<i32>} : memref<1x512xf32, #tpu.memory_space<vmem>>, vector<1x512xf32>,
    return
  }
}

</mosaic_0001>

<llo_original>
// kernel: tpu_custom_call.1
$region0: #{tpu_custom_call.1}
  #allocation0 [shape = 'u32[]', space=smem, size = 0x4, offset = 0x4, fixed_abs, tag = 'smem constant byte address 0x4 - core index']
  #allocation1 [shape = 'u32[72,128]{1,0:T(1,128)}', space=vmem, size = 0x9000, scoped, tag = 'internal scratch']
  %s0 = inlined_call_operand.hbm [shape: f32[2,32,256], index: 0, kind: input, shape index: {}]
  %s1 = inlined_call_operand.vmem [shape: f32[3,16,32], index: 1, kind: input, shape index: {}]
  %s2 = inlined_call_operand.vmem [shape: f32[3,16,2], index: 2, kind: input, shape index: {}]
  %s3 = inlined_call_operand.hbm [shape: f32[1,512], index: 3, kind: output, shape index: {}]
  %s4 = sld [smem:[#allocation0]]
  $region26: #{tpu_custom_call.1} parent=0
    _
  %s6 = ssub.s32 1, %s4
  %s7 = scalar_select 0, %s6, %s4
  $region1: #{tpu_custom_call.1} parent=0
    #allocation2 [shape = 'u8[65536]{0}', space=vmem, size = 0x10000, scoped, tag = 'input window, operand 0, single buffered']
    #allocation3 [shape = 's32[1]{0}', space=sflag, size = 0x4, scoped, tag = 'scoped memory for tpu_custom_call.1']
    #allocation4 [shape = 's32[1]{0}', space=sflag, size = 0x4, scoped, tag = 'scoped memory for tpu_custom_call.1']
    #allocation5 [shape = 'u8[2048]{0}', space=vmem, size = 0x800, scoped, tag = 'output window, operand 0, single buffered']
    %8 = vsyncpa [#allocation3], 0
    %9 = vsyncpa [#allocation4], 0
    // Predicated region
    $region2: #{tpu_custom_call.1} parent=1 // pred_check
      _
    $region3: #{tpu_custom_call.1} parent=1 // pred_check_branch
      %11 = sbr.rel (0) target = $region5
    $region4: #{tpu_custom_call.1} parent=1 // pred_region
      %13 = vsyncadd [#allocation3], 0
      %s14 = sshll.u32 %s0, 4
      %s15 = int_to_ptr.hbm [resolvable:$true] %s14
      %s16 = sshll.u32 [#allocation2], 4
      %s17 = int_to_ptr.vmem [resolvable:$true] %s16
      %22 = dma.hbm_to_vmem [thread:$0]  %s15, 2048, %s17, [#allocation3], 256, 256, 16
    $region5: #{tpu_custom_call.1} parent=1 // pred_fallthru
      _
    // Predicated region
    $region6: #{tpu_custom_call.1} parent=1 // pred_check
      _
    $region7: #{tpu_custom_call.1} parent=1 // pred_check_branch
      %24 = sbr.rel (0) target = $region9
    $region8: #{tpu_custom_call.1} parent=1 // pred_region
      _
    $region9: #{tpu_custom_call.1} parent=1 // pred_fallthru
      _
    // Predicated region
    $region10: #{tpu_custom_call.1} parent=1 // pred_check
      _
    $region11: #{tpu_custom_call.1} parent=1 // pred_check_branch
      %26 = sbr.rel (0) target = $region13
    $region12: #{tpu_custom_call.1} parent=1 // pred_region
      _
    $region13: #{tpu_custom_call.1} parent=1 // pred_fallthru
      _
    // Predicated region
    $region14: #{tpu_custom_call.1} parent=1 // pred_check
      _
    $region15: #{tpu_custom_call.1} parent=1 // pred_check_branch
      %28 = sbr.rel (0) target = $region17
    $region16: #{tpu_custom_call.1} parent=1 // pred_region
      %30 = dma.done [#allocation3], 2048
    $region17: #{tpu_custom_call.1} parent=1 // pred_fallthru
      _
    %v31 = vld [vmem:[%s1] sm:$0xff]
    %v32 = vld [vmem:[%s1 + $0x8] sm:$0xff]
    %s33 = scalar_lea.vmem %s1, 16
    %v34 = vld [vmem:[%s33] sm:$0xff]
    %s35 = scalar_lea.vmem %s1, 32
    %v36 = vld [vmem:[%s35] sm:$0xff]
    %v37 = vld [vmem:[#allocation2] sm:$0xff]
    %v38 = vld [vmem:[#allocation2 + $0x8] sm:$0xff]
    %v39 = vld [vmem:[#allocation2 + $0x10] sm:$0xff]
    %v40 = vld [vmem:[#allocation2 + $0x18] sm:$0xff]
    %v41 = vld [vmem:[#allocation2 + $0x20] sm:$0xff]
    %v42 = vld [vmem:[#allocation2 + $0x28] sm:$0xff]
    %v43 = vld [vmem:[#allocation2 + $0x30] sm:$0xff]
    %v44 = vld [vmem:[#allocation2 + $0x38] sm:$0xff]
    %vm45 = vcmask 261120
    %v47 = vsel %vm45, %v31, 0
    %v50 = vsel %vm45, %v32, 0
    %52 = vmatpush.msra.mxu0 0.0
    %53 = vmatpush.msra.mxu0 0.0
    %54 = vmatpush.msra.mxu0 0.0
    %55 = vmatpush.msra.mxu0 0.0
    %56 = vmatpush.msra.mxu0 0.0
    %57 = vmatpush.msra.mxu0 0.0
    %58 = vmatpush.msra.mxu0 0.0
    %59 = vmatpush.msra.mxu0 0.0
    %60 = vmatpush.msra.mxu0 0.0
    %61 = vmatpush.msra.mxu0 0.0
    %62 = vmatpush.msra.mxu0 0.0
    %63 = vmatpush.msra.mxu0 0.0
    %64 = vmatpush.msra.mxu0 %v43
    %65 = vmatpush.msra.mxu0 %v41
    %66 = vmatpush.msra.mxu0 %v39
    %67 = vmatpush.msra.mxu0 %v37
    %68 = vmatmul.f32.gmra.mxu0 %v47
    %v69 = vpop.f32.mrf.mxu0
    %v70 = vadd.f32 0.0, %v69
    %71 = vmatmul.f32.gmra.mxu0 %v50
    %v72 = vpop.f32.mrf.mxu0
    %v73 = vadd.f32 0.0, %v72
    %74 = vdwg.mxu0
    %75 = vmatpush.msra.mxu0 0.0
    %76 = vmatpush.msra.mxu0 0.0
    %77 = vmatpush.msra.mxu0 0.0
    %78 = vmatpush.msra.mxu0 0.0
    %79 = vmatpush.msra.mxu0 0.0
    %80 = vmatpush.msra.mxu0 0.0
    %81 = vmatpush.msra.mxu0 0.0
    %82 = vmatpush.msra.mxu0 0.0
    %83 = vmatpush.msra.mxu0 0.0
    %84 = vmatpush.msra.mxu0 0.0
    %85 = vmatpush.msra.mxu0 0.0
    %86 = vmatpush.msra.mxu0 0.0
    %87 = vmatpush.msra.mxu0 %v44
    %88 = vmatpush.msra.mxu0 %v42
    %89 = vmatpush.msra.mxu0 %v40
    %90 = vmatpush.msra.mxu0 %v38
    %91 = vmatmul.f32.gmra.mxu0 %v47
    %v92 = vpop.f32.mrf.mxu0
    %v93 = vadd.f32 0.0, %v92
    %94 = vmatmul.f32.gmra.mxu0 %v50
    %v95 = vpop.f32.mrf.mxu0
    %v96 = vadd.f32 0.0, %v95
    %97 = vdwg.mxu0
    %s98 = scalar_lea.vmem [#allocation2], 64
    %v99 = vld [vmem:[%s98] sm:$0xff]
    %v100 = vld [vmem:[%s98 + $0x8] sm:$0xff]
    %v101 = vld [vmem:[%s98 + $0x10] sm:$0xff]
    %v102 = vld [vmem:[%s98 + $0x18] sm:$0xff]
    %v103 = vld [vmem:[%s98 + $0x20] sm:$0xff]
    %v104 = vld [vmem:[%s98 + $0x28] sm:$0xff]
    %v105 = vld [vmem:[%s98 + $0x30] sm:$0xff]
    %v106 = vld [vmem:[%s98 + $0x38] sm:$0xff]
    %107 = vmatpush.msra.mxu0 0.0
    %108 = vmatpush.msra.mxu0 0.0
    %109 = vmatpush.msra.mxu0 0.0
    %110 = vmatpush.msra.mxu0 0.0
    %111 = vmatpush.msra.mxu0 0.0
    %112 = vmatpush.msra.mxu0 0.0
    %113 = vmatpush.msra.mxu0 0.0
    %114 = vmatpush.msra.mxu0 0.0
    %115 = vmatpush.msra.mxu0 0.0
    %116 = vmatpush.msra.mxu0 0.0
    %117 = vmatpush.msra.mxu0 0.0
    %118 = vmatpush.msra.mxu0 0.0
    %119 = vmatpush.msra.mxu0 %v105
    %120 = vmatpush.msra.mxu0 %v103
    %121 = vmatpush.msra.mxu0 %v101
    %122 = vmatpush.msra.mxu0 %v99
    %123 = vmatmul.f32.gmra.mxu0 %v47
    %v124 = vpop.f32.mrf.mxu0
    %v125 = vadd.f32 0.0, %v124
    %126 = vmatmul.f32.gmra.mxu0 %v50
    %v127 = vpop.f32.mrf.mxu0
    %v128 = vadd.f32 0.0, %v127
    %129 = vdwg.mxu0
    %130 = vmatpush.msra.mxu0 0.0
    %131 = vmatpush.msra.mxu0 0.0
    %132 = vmatpush.msra.mxu0 0.0
    %133 = vmatpush.msra.mxu0 0.0
    %134 = vmatpush.msra.mxu0 0.0
    %135 = vmatpush.msra.mxu0 0.0
    %136 = vmatpush.msra.mxu0 0.0
    %137 = vmatpush.msra.mxu0 0.0
    %138 = vmatpush.msra.mxu0 0.0
    %139 = vmatpush.msra.mxu0 0.0
    %140 = vmatpush.msra.mxu0 0.0
    %141 = vmatpush.msra.mxu0 0.0
    %142 = vmatpush.msra.mxu0 %v106
    %143 = vmatpush.msra.mxu0 %v104
    %144 = vmatpush.msra.mxu0 %v102
    %145 = vmatpush.msra.mxu0 %v100
    %146 = vmatmul.f32.gmra.mxu0 %v47
    %v147 = vpop.f32.mrf.mxu0
    %v148 = vadd.f32 0.0, %v147
    %149 = vmatmul.f32.gmra.mxu0 %v50
    %v150 = vpop.f32.mrf.mxu0
    %v151 = vadd.f32 0.0, %v150
    %152 = vdwg.mxu0
    %v153 = vld [vmem:[%s2] sm:$0xff]
    %v154 = vld [vmem:[%s2 + $0x8] sm:$0xff]
    %v155 = vadd.f32 %v70, %v93
    %v156 = vadd.f32 %v155, %v125
    %v157 = vadd.f32 %v156, %v148
    %158 = vadd.xlane.f32.xlu0 %v157
    %v159 = vpop.xlane.xlu0 %158
    %v160 = vadd.f32 %v73, %v96
    %v161 = vadd.f32 %v160, %v128
    %v162 = vadd.f32 %v161, %v151
    %163 = vadd.xlane.f32.xlu0 %v162
    %v164 = vpop.xlane.xlu0 %163
    %v165 = vmul.f32 %v159, 0.001953125
    %v166 = vmul.f32 %v164, 0.001953125
    %v167 = vsub.f32 %v70, %v165
    %v168 = vsub.f32 %v93, %v165
    %v169 = vsub.f32 %v125, %v165
    %v170 = vsub.f32 %v148, %v165
    %v171 = vsub.f32 %v73, %v166
    %v172 = vsub.f32 %v96, %v166
    %v173 = vsub.f32 %v128, %v166
    %v174 = vsub.f32 %v151, %v166
    %v175 = vmul.f32 %v167, %v167
    %v176 = vmul.f32 %v168, %v168
    %v177 = vmul.f32 %v169, %v169
    %v178 = vmul.f32 %v170, %v170
    %v179 = vmul.f32 %v171, %v171
    %v180 = vmul.f32 %v172, %v172
    %v181 = vmul.f32 %v173, %v173
    %v182 = vmul.f32 %v174, %v174
    %v183 = vadd.f32 %v175, %v176
    %v184 = vadd.f32 %v183, %v177
    %v185 = vadd.f32 %v184, %v178
    %186 = vadd.xlane.f32.xlu0 %v185
    %v187 = vpop.xlane.xlu0 %186
    %v188 = vadd.f32 %v179, %v180
    %v189 = vadd.f32 %v188, %v181
    %v190 = vadd.f32 %v189, %v182
    %191 = vadd.xlane.f32.xlu0 %v190
    %v192 = vpop.xlane.xlu0 %191
    %v193 = vmul.f32 %v187, 0.001953125
    %v194 = vmul.f32 %v192, 0.001953125
    %v195 = vadd.f32 %v193, 1e-05
    %v196 = vadd.f32 %v194, 1e-05
    %v197 = vrsqrt.pop %v195
    %v198 = vmul.f32 %v197, %v195
    %v199 = vmul.f32 %v198, %v197
    %v200 = vmul.f32 0.5, %v199
    %v201 = vsub.f32 1.5, %v200
    %v202 = vmul.f32 %v197, %v201
    %vm203 = vweird.f32 %v195
    %vm204 = vweird.f32 %v197
    %vm205 = vmor %vm203, %vm204
    %v206 = vsel %vm205, %v197, %v202
    %v207 = vrsqrt.pop %v196
    %v208 = vmul.f32 %v207, %v196
    %v209 = vmul.f32 %v208, %v207
    %v210 = vmul.f32 0.5, %v209
    %v211 = vsub.f32 1.5, %v210
    %v212 = vmul.f32 %v207, %v211
    %vm213 = vweird.f32 %v196
    %vm214 = vweird.f32 %v207
    %vm215 = vmor %vm213, %vm214
    %v216 = vsel %vm215, %v207, %v212
    %v217 = vmul.f32 %v153, %v206
    %v218 = vmul.f32 %v154, %v216
    %v219 = vmul.f32 %v165, %v217
    %v220 = vmul.f32 %v166, %v218
    %223 = vrot.lane.b32.xlu0 %v219, 1
    %v224 = vpop.permute.xlu0 %223
    %225 = vrot.lane.b32.xlu0 %v220, 1
    %v226 = vpop.permute.xlu0 %225
    %v229 = vsub.f32 %v153, %v224
    %v230 = vsub.f32 %v154, %v226
    %232 = vset.pattern.permute.xlu0 0
    %233 = vperm.xlu0 %232, %v217
    %v234 = vpop.permute.xlu0 %233
    %237 = vset.pattern.permute.xlu0 0
    %238 = vperm.xlu0 %237, %v218
    %v239 = vpop.permute.xlu0 %238
    %v241 = vmul.f32 %v70, %v234
    %v242 = vmul.f32 %v93, %v234
    %v243 = vmul.f32 %v125, %v234
    %v244 = vmul.f32 %v148, %v234
    %v245 = vmul.f32 %v73, %v239
    %v246 = vmul.f32 %v96, %v239
    %v247 = vmul.f32 %v128, %v239
    %v248 = vmul.f32 %v151, %v239
    %250 = vset.pattern.permute.xlu0 1
    %251 = vperm.xlu0 %250, %v229
    %v252 = vpop.permute.xlu0 %251
    %255 = vset.pattern.permute.xlu0 1
    %256 = vperm.xlu0 %255, %v230
    %v257 = vpop.permute.xlu0 %256
    %v259 = vadd.f32 %v241, %v252
    %v260 = vadd.f32 %v242, %v252
    %v261 = vadd.f32 %v243, %v252
    %v262 = vadd.f32 %v244, %v252
    %v263 = vadd.f32 %v245, %v257
    %v264 = vadd.f32 %v246, %v257
    %v265 = vadd.f32 %v247, %v257
    %v266 = vadd.f32 %v248, %v257
    %v267 = vmax.f32 %v259, 0.0
    %v268 = vmax.f32 %v260, 0.0
    %v269 = vmax.f32 %v261, 0.0
    %v270 = vmax.f32 %v262, 0.0
    %v271 = vmax.f32 %v263, 0.0
    %v272 = vmax.f32 %v264, 0.0
    %v273 = vmax.f32 %v265, 0.0
    %v274 = vmax.f32 %v266, 0.0
    %vm275 = vcmask 130048
    %v277 = vsel %vm275, %v34, 0
    %279 = vmatpush.msra.mxu0 0.0
    %280 = vmatpush.msra.mxu0 0.0
    %281 = vmatpush.msra.mxu0 0.0
    %282 = vmatpush.msra.mxu0 0.0
    %283 = vmatpush.msra.mxu0 0.0
    %284 = vmatpush.msra.mxu0 0.0
    %285 = vmatpush.msra.mxu0 0.0
    %286 = vmatpush.msra.mxu0 0.0
    %287 = vmatpush.msra.mxu0 0.0
    %288 = vmatpush.msra.mxu0 0.0
    %289 = vmatpush.msra.mxu0 0.0
    %290 = vmatpush.msra.mxu0 0.0
    %291 = vmatpush.msra.mxu0 0.0
    %292 = vmatpush.msra.mxu0 0.0
    %293 = vmatpush.msra.mxu0 %v271
    %294 = vmatpush.msra.mxu0 %v267
    %295 = vmatmul.f32.gmra.mxu0 %v277
    %v296 = vpop.f32.mrf.mxu0
    %v297 = vadd.f32 0.0, %v296
    %298 = vdwg.mxu0
    %299 = vmatpush.msra.mxu0 0.0
    %300 = vmatpush.msra.mxu0 0.0
    %301 = vmatpush.msra.mxu0 0.0
    %302 = vmatpush.msra.mxu0 0.0
    %303 = vmatpush.msra.mxu0 0.0
    %304 = vmatpush.msra.mxu0 0.0
    %305 = vmatpush.msra.mxu0 0.0
    %306 = vmatpush.msra.mxu0 0.0
    %307 = vmatpush.msra.mxu0 0.0
    %308 = vmatpush.msra.mxu0 0.0
    %309 = vmatpush.msra.mxu0 0.0
    %310 = vmatpush.msra.mxu0 0.0
    %311 = vmatpush.msra.mxu0 0.0
    %312 = vmatpush.msra.mxu0 0.0
    %313 = vmatpush.msra.mxu0 %v272
    %314 = vmatpush.msra.mxu0 %v268
    %315 = vmatmul.f32.gmra.mxu0 %v277
    %v316 = vpop.f32.mrf.mxu0
    %v317 = vadd.f32 0.0, %v316
    %318 = vdwg.mxu0
    %319 = vmatpush.msra.mxu0 0.0
    %320 = vmatpush.msra.mxu0 0.0
    %321 = vmatpush.msra.mxu0 0.0
    %322 = vmatpush.msra.mxu0 0.0
    %323 = vmatpush.msra.mxu0 0.0
    %324 = vmatpush.msra.mxu0 0.0
    %325 = vmatpush.msra.mxu0 0.0
    %326 = vmatpush.msra.mxu0 0.0
    %327 = vmatpush.msra.mxu0 0.0
    %328 = vmatpush.msra.mxu0 0.0
    %329 = vmatpush.msra.mxu0 0.0
    %330 = vmatpush.msra.mxu0 0.0
    %331 = vmatpush.msra.mxu0 0.0
    %332 = vmatpush.msra.mxu0 0.0
    %333 = vmatpush.msra.mxu0 %v273
    %334 = vmatpush.msra.mxu0 %v269
    %335 = vmatmul.f32.gmra.mxu0 %v277
    %v336 = vpop.f32.mrf.mxu0
    %v337 = vadd.f32 0.0, %v336
    %338 = vdwg.mxu0
    %339 = vmatpush.msra.mxu0 0.0
    %340 = vmatpush.msra.mxu0 0.0
    %341 = vmatpush.msra.mxu0 0.0
    %342 = vmatpush.msra.mxu0 0.0
    %343 = vmatpush.msra.mxu0 0.0
    %344 = vmatpush.msra.mxu0 0.0
    %345 = vmatpush.msra.mxu0 0.0
    %346 = vmatpush.msra.mxu0 0.0
    %347 = vmatpush.msra.mxu0 0.0
    %348 = vmatpush.msra.mxu0 0.0
    %349 = vmatpush.msra.mxu0 0.0
    %350 = vmatpush.msra.mxu0 0.0
    %351 = vmatpush.msra.mxu0 0.0
    %352 = vmatpush.msra.mxu0 0.0
    %353 = vmatpush.msra.mxu0 %v274
    %354 = vmatpush.msra.mxu0 %v270
    %355 = vmatmul.f32.gmra.mxu0 %v277
    %v356 = vpop.f32.mrf.mxu0
    %v357 = vadd.f32 0.0, %v356
    %358 = vdwg.mxu0
    %s359 = scalar_lea.vmem %s2, 16
    %v360 = vld [vmem:[%s359] sm:$0xff]
    %v361 = vadd.f32 %v297, %v317
    %v362 = vadd.f32 %v361, %v337
    %v363 = vadd.f32 %v362, %v357
    %364 = vadd.xlane.f32.xlu0 %v363
    %v365 = vpop.xlane.xlu0 %364
    %v366 = vmul.f32 %v365, 0.001953125
    %v367 = vsub.f32 %v297, %v366
    %v368 = vsub.f32 %v317, %v366
    %v369 = vsub.f32 %v337, %v366
    %v370 = vsub.f32 %v357, %v366
    %v371 = vmul.f32 %v367, %v367
    %v372 = vmul.f32 %v368, %v368
    %v373 = vmul.f32 %v369, %v369
    %v374 = vmul.f32 %v370, %v370
    %v375 = vadd.f32 %v371, %v372
    %v376 = vadd.f32 %v375, %v373
    %v377 = vadd.f32 %v376, %v374
    %378 = vadd.xlane.f32.xlu0 %v377
    %v379 = vpop.xlane.xlu0 %378
    %v380 = vmul.f32 %v379, 0.001953125
    %v381 = vadd.f32 %v380, 1e-05
    %v382 = vrsqrt.pop %v381
    %v383 = vmul.f32 %v382, %v381
    %v384 = vmul.f32 %v383, %v382
    %v385 = vmul.f32 0.5, %v384
    %v386 = vsub.f32 1.5, %v385
    %v387 = vmul.f32 %v382, %v386
    %vm388 = vweird.f32 %v381
    %vm389 = vweird.f32 %v382
    %vm390 = vmor %vm388, %vm389
    %v391 = vsel %vm390, %v382, %v387
    %v392 = vmul.f32 %v360, %v391
    %v393 = vmul.f32 %v366, %v392
    %395 = vrot.lane.b32.xlu0 %v393, 1
    %v396 = vpop.permute.xlu0 %395
    %v398 = vsub.f32 %v360, %v396
    %400 = vset.pattern.permute.xlu0 0
    %401 = vperm.xlu0 %400, %v392
    %v402 = vpop.permute.xlu0 %401
    %v404 = vmul.f32 %v297, %v402
    %v405 = vmul.f32 %v317, %v402
    %v406 = vmul.f32 %v337, %v402
    %v407 = vmul.f32 %v357, %v402
    %409 = vset.pattern.permute.xlu0 1
    %410 = vperm.xlu0 %409, %v398
    %v411 = vpop.permute.xlu0 %410
    %v413 = vadd.f32 %v404, %v411
    %v414 = vadd.f32 %v405, %v411
    %v415 = vadd.f32 %v406, %v411
    %v416 = vadd.f32 %v407, %v411
    %v417 = vmax.f32 %v413, 0.0
    %v418 = vmax.f32 %v414, 0.0
    %v419 = vmax.f32 %v415, 0.0
    %v420 = vmax.f32 %v416, 0.0
    %422 = vset.pattern.permute.xlu0 0
    %423 = vperm.xlu0 %422, %v36
    %v424 = vpop.permute.xlu0 %423
    %v426 = vmul.f32 %v424, %v417
    %v427 = vmul.f32 %v424, %v418
    %v428 = vmul.f32 %v424, %v419
    %v429 = vmul.f32 %v424, %v420
    %v430 = vrot.slane %v426, 4
    %v431 = vadd.f32 %v426, %v430
    %v432 = vrot.slane %v431, 2
    %v433 = vadd.f32 %v431, %v432
    %v434 = vrot.slane %v433, 1
    %v435 = vadd.f32 %v433, %v434
    %v436 = vrot.slane %v427, 4
    %v437 = vadd.f32 %v427, %v436
    %v438 = vrot.slane %v437, 2
    %v439 = vadd.f32 %v437, %v438
    %v440 = vrot.slane %v439, 1
    %v441 = vadd.f32 %v439, %v440
    %v442 = vrot.slane %v428, 4
    %v443 = vadd.f32 %v428, %v442
    %v444 = vrot.slane %v443, 2
    %v445 = vadd.f32 %v443, %v444
    %v446 = vrot.slane %v445, 1
    %v447 = vadd.f32 %v445, %v446
    %v448 = vrot.slane %v429, 4
    %v449 = vadd.f32 %v429, %v448
    %v450 = vrot.slane %v449, 2
    %v451 = vadd.f32 %v449, %v450
    %v452 = vrot.slane %v451, 1
    %v453 = vadd.f32 %v451, %v452
    %s454 = scalar_lea.vmem %s2, 32
    %v455 = vld [vmem:[%s454] sm:$0x1]
    %v456 = vadd.f32 %v435, %v441
    %v457 = vadd.f32 %v456, %v447
    %v458 = vadd.f32 %v457, %v453
    %459 = vadd.xlane.f32.xlu0 %v458
    %v460 = vpop.xlane.xlu0 %459
    %v461 = vmul.f32 %v460, 0.001953125
    %v462 = vsub.f32 %v435, %v461
    %v463 = vsub.f32 %v441, %v461
    %v464 = vsub.f32 %v447, %v461
    %v465 = vsub.f32 %v453, %v461
    %v466 = vmul.f32 %v462, %v462
    %v467 = vmul.f32 %v463, %v463
    %v468 = vmul.f32 %v464, %v464
    %v469 = vmul.f32 %v465, %v465
    %v470 = vadd.f32 %v466, %v467
    %v471 = vadd.f32 %v470, %v468
    %v472 = vadd.f32 %v471, %v469
    %473 = vadd.xlane.f32.xlu0 %v472
    %v474 = vpop.xlane.xlu0 %473
    %v475 = vmul.f32 %v474, 0.001953125
    %v476 = vadd.f32 %v475, 1e-05
    %v477 = vrsqrt.pop %v476
    %v478 = vmul.f32 %v477, %v476
    %v479 = vmul.f32 %v478, %v477
    %v480 = vmul.f32 0.5, %v479
    %v481 = vsub.f32 1.5, %v480
    %v482 = vmul.f32 %v477, %v481
    %vm483 = vweird.f32 %v476
    %vm484 = vweird.f32 %v477
    %vm485 = vmor %vm483, %vm484
    %v486 = vsel %vm485, %v477, %v482
    %v487 = vmul.f32 %v455, %v486
    %v488 = vmul.f32 %v461, %v487
    %490 = vrot.lane.b32.xlu0 %v488, 1
    %v491 = vpop.permute.xlu0 %490
    %v493 = vsub.f32 %v455, %v491
    %495 = vset.pattern.permute.xlu0 0
    %496 = vperm.xlu0 %495, %v487
    %v497 = vpop.permute.xlu0 %496
    %v499 = vmul.f32 %v435, %v497
    %v500 = vmul.f32 %v441, %v497
    %v501 = vmul.f32 %v447, %v497
    %v502 = vmul.f32 %v453, %v497
    %504 = vset.pattern.permute.xlu0 1
    %505 = vperm.xlu0 %504, %v493
    %v506 = vpop.permute.xlu0 %505
    %v508 = vadd.f32 %v499, %v506
    %v509 = vadd.f32 %v500, %v506
    %v510 = vadd.f32 %v501, %v506
    %v511 = vadd.f32 %v502, %v506
    %v512 = vmax.f32 %v508, 0.0
    %v513 = vmax.f32 %v509, 0.0
    %v514 = vmax.f32 %v510, 0.0
    %v515 = vmax.f32 %v511, 0.0
    %v520 = vrot.slane %v513, 7
    %v521 = vrot.slane %v514, 6
    %v522 = vrot.slane %v515, 5
    %vm523 = vcmask 1040384
    %v524 = vsel %vm523, %v512, %v520
    %vm525 = vcmask 1042434
    %v526 = vsel %vm525, %v521, %v522
    %vm527 = vcmask 1041408
    %v528 = vsel %vm527, %v524, %v526
    %v530 = vlaneseq
    %vm531 = vcmp.ge.s32.totalorder %v530, 0
    %vm532 = vcmp.lt.s32.totalorder %v530, 512
    %vm533 = vmand %vm531, %vm532
    %534 = vst.msk [vmem:[#allocation5] sm:$0xf] %vm533, %v528
    // Predicated region
    $region18: #{tpu_custom_call.1} parent=1 // pred_check
      _
    $region19: #{tpu_custom_call.1} parent=1 // pred_check_branch
      %536 = sbr.rel (0) target = $region21
    $region20: #{tpu_custom_call.1} parent=1 // pred_region
      %538 = vsyncadd [#allocation4], 0
      %s540 = sshll.u32 [#allocation5], 4
      %s541 = int_to_ptr.vmem [resolvable:$true] %s540
      %s542 = sshll.u32 %s3, 4
      %s543 = int_to_ptr.hbm [resolvable:$true] %s542
      %545 = dma.vmem_to_hbm [thread:$0]  %s541, 64, %s543, [#allocation4]
    $region21: #{tpu_custom_call.1} parent=1 // pred_fallthru
      _
    // Predicated region
    $region22: #{tpu_custom_call.1} parent=1 // pred_check
      _
    $region23: #{tpu_custom_call.1} parent=1 // pred_check_branch
      %547 = sbr.rel (0) target = $region25
    $region24: #{tpu_custom_call.1} parent=1 // pred_region
      %549 = dma.done [#allocation4], 64
    $region25: #{tpu_custom_call.1} parent=1 // pred_fallthru
      _
    %550 = vsyncpa [#allocation3], 1
    %551 = vsyncpa [#allocation4], 1

</llo_original>
